<compile_context>
chip_gen: v7x
topology: tpu7x:2x2x1
jax: 0.10.0
libtpu: 0.0.40
codegen_flags: <defaults>
</compile_context>

<pallas_src>
from typing import NamedTuple

import jax
import jax.numpy as jnp
from jax import lax
from jax.experimental import pallas as pl
from jax.experimental.pallas import tpu as pltpu

EPS = 1e-5
_LANE = 128
_VMEM_BUDGET = 40 * 1024 * 1024   # conservative: fits v7x's 64 MiB VMEM with headroom


def _round_up(n: int, m: int) -> int:
    return (n + m - 1) // m * m


def _vmem_estimate(b: int, cp: int, tn: int, mm_bytes: int) -> int:
    x_in = 2 * b * cp * 4            # f32 x (BlockSpec double-buffers even constant blocks)
    w_in = 2 * cp * tn * mm_bytes    # weight tile, double-buffered
    gb_in = 2 * 2 * 2 * tn * 4       # gamma/beta tiles
    out = 2 * b * tn * 4             # output tile, double-buffered
    h1 = b * cp * mm_bytes           # resident hidden-activation scratch (single buffer)
    return x_in + w_in + gb_in + out + h1


def _pick_tn(b: int, cp: int, mm_bytes: int) -> int:
    # Largest lane-dense output-channel tile that divides Cp and fits the budget.
    for tn in (512, 256, 128):
        if cp % tn == 0 and _vmem_estimate(b, cp, tn, mm_bytes) <= _VMEM_BUDGET:
            return tn
    return _LANE


class ResFCParams(NamedTuple):
    in_channels: int
    padded_channels: int
    w: jax.Array       # (2, Cp, Cp) matmul dtype, pre-transposed: x @ w[i] == x @ W_i^T
    gamma: jax.Array   # (2, 1, Cp) f32
    beta: jax.Array    # (2, 1, Cp) f32


def prepare_res_fc_params(w1, g1, be1, w2, g2, be2, *, matmul_dtype=jnp.bfloat16):
    """One-time weight preparation (pad to lane-dense Cp, transpose, cast).

    Call once and reuse across forward passes - this is the hoisted pad/cast the
    review asked for.  w1/w2 are PyTorch Linear weights (out_features, in_features).
    """
    C = w1.shape[0]
    Cp = _round_up(C, _LANE)
    pad = Cp - C

    def pad_wt(w):  # transpose so the kernel does a plain (B,K)x(K,TN) dot
        wt = jnp.asarray(w, jnp.float32).T
        return jnp.pad(wt, ((0, pad), (0, pad))).astype(matmul_dtype)

    def pad_vec(v):
        return jnp.pad(jnp.asarray(v, jnp.float32), (0, pad)).reshape(1, Cp)

    w_all = jnp.stack([pad_wt(w1), pad_wt(w2)])       # (2, Cp, Cp)
    g_all = jnp.stack([pad_vec(g1), pad_vec(g2)])     # (2, 1, Cp)
    b_all = jnp.stack([pad_vec(be1), pad_vec(be2)])   # (2, 1, Cp)
    return ResFCParams(C, Cp, w_all, g_all, b_all)


def _res_fc_kernel(x_ref, w_ref, g_ref, b_ref, o_ref, h1_ref):
    """Fused 2-stage kernel.

    grid = (2, num_channel_tiles); stage 0 fills the resident h1 scratch tile by
    tile, stage 1 consumes the full h1 scratch and writes the output tile.
    x_ref:  (B, Cp)  f32   (constant block, fetched once)
    w_ref:  (1, Cp, TN)    matmul dtype, pre-transposed weight tile of stage `s`
    g_ref/b_ref: (1, 1, TN) f32 gamma/beta tile of stage `s`
    o_ref:  (B, TN)        output tile (written only in stage 1)
    h1_ref: (B, Cp)        matmul-dtype scratch, persists across grid steps
    """
    stage = pl.program_id(0)
    j = pl.program_id(1)
    tn = w_ref.shape[2]
    off = pl.multiple_of(j * tn, _LANE)
    inv_b = 1.0 / x_ref.shape[0]

    wt = w_ref[0]          # (Cp, TN)
    gamma = g_ref[0]       # (1, TN)
    beta = b_ref[0]        # (1, TN)

    def bn(h):
        # Two-pass batch statistics (exact BatchNorm1d train-mode, biased var).
        mu = jnp.sum(h, axis=0, keepdims=True) * inv_b
        d = h - mu
        var = jnp.sum(d * d, axis=0, keepdims=True) * inv_b
        return d * lax.rsqrt(var + EPS) * gamma + beta

    @pl.when(stage == 0)
    def _():
        # fc1: Linear (bias cancelled by BN) -> BN -> ReLU, into resident scratch.
        h = jnp.dot(x_ref[...].astype(wt.dtype), wt,
                    preferred_element_type=jnp.float32)
        h = jnp.maximum(bn(h), 0.0)
        h1_ref[:, pl.ds(off, tn)] = h.astype(h1_ref.dtype)

    @pl.when(stage == 1)
    def _():
        # fc2: Linear -> BN -> + identity -> ReLU.
        h = jnp.dot(h1_ref[...], wt, preferred_element_type=jnp.float32)
        h = bn(h)
        res = x_ref[:, pl.ds(off, tn)]        # exact f32 residual
        o_ref[...] = jnp.maximum(h + res, 0.0).astype(o_ref.dtype)


def res_fc_block_apply(x, params: ResFCParams):
    """Forward pass using pre-prepared params.  x: (B, C)."""
    B, C = x.shape
    assert C == params.in_channels, "channel mismatch vs prepared params"
    Cp = params.padded_channels
    mm_dtype = params.w.dtype
    mm_bytes = jnp.dtype(mm_dtype).itemsize

    pad = Cp - C
    xf = x.astype(jnp.float32)
    xp = xf if pad == 0 else jnp.pad(xf, ((0, 0), (0, pad)))

    TN = _pick_tn(B, Cp, mm_bytes)
    nt = Cp // TN
    need = _vmem_estimate(B, Cp, TN, mm_bytes)
    # Raise v5e's 16 MiB scoped default when needed; stay under v7x's 64 MiB physical.
    vmem_limit = max(32 * 1024 * 1024, min(2 * need, 64 * 1024 * 1024))

    out_p = pl.pallas_call(
        _res_fc_kernel,
        out_shape=jax.ShapeDtypeStruct((B, Cp), x.dtype),
        grid_spec=pltpu.PrefetchScalarGridSpec(
            num_scalar_prefetch=0,
            grid=(2, nt),                                   # (stage, channel tile)
            in_specs=[
                pl.BlockSpec((B, Cp), lambda s, j: (0, 0)),        # x: fetched once
                pl.BlockSpec((1, Cp, TN), lambda s, j: (s, 0, j)),  # weight tile of stage s
                pl.BlockSpec((1, 1, TN), lambda s, j: (s, 0, j)),   # gamma tile
                pl.BlockSpec((1, 1, TN), lambda s, j: (s, 0, j)),   # beta tile
            ],
            # Stays on block (0,0) through stage 0 (no writeback of unwritten data),
            # then walks the channel tiles in stage 1 where the kernel fully writes it.
            out_specs=pl.BlockSpec((B, TN), lambda s, j: (0, s * j)),
            scratch_shapes=[pltpu.VMEM((B, Cp), mm_dtype)],        # resident h1
        ),
        compiler_params=pltpu.CompilerParams(
            dimension_semantics=("arbitrary", "arbitrary"),
            vmem_limit_bytes=vmem_limit,
        ),
    )(xp, params.w, params.gamma, params.beta)

    return out_p[:, :C] if pad else out_p


def res_fc_block(x, w1, b1, g1, be1, w2, b2, g2, be2, *, matmul_dtype=jnp.bfloat16):
    """Convenience wrapper (signature parity).  b1/b2 are exact no-ops in the
    forward math: a bias added before train-mode BatchNorm is cancelled by the
    batch-mean subtraction.  For repeated use, call prepare_res_fc_params once
    and res_fc_block_apply per step instead."""
    del b1, b2
    params = prepare_res_fc_params(w1, g1, be1, w2, g2, be2, matmul_dtype=matmul_dtype)
    return res_fc_block_apply(x, params)


def res_fc_block_ref(x, w1, b1, g1, be1, w2, b2, g2, be2):
    """Pure-JAX f32 reference (mirrors the PyTorch module in train mode, incl. biases)."""
    def bn(h, g, be):
        mu = jnp.mean(h, axis=0, keepdims=True)
        var = jnp.mean((h - mu) ** 2, axis=0, keepdims=True)
        return (h - mu) / jnp.sqrt(var + EPS) * g + be

    identity = x
    h = x @ w1.T + b1
    h = jnp.maximum(bn(h, g1, be1), 0.0)
    h = h @ w2.T + b2
    h = bn(h, g2, be2)
    return jnp.maximum(h + identity, 0.0)


if __name__ == "__main__":
    B, C = 8, 32  # small shapes: batch=8, in_channels=32

    key = jax.random.PRNGKey(0)
    kx, kw1, kb1, kw2, kb2, kg1, kbe1, kg2, kbe2 = jax.random.split(key, 9)

    x = jax.random.normal(kx, (B, C), dtype=jnp.float32)

    # Deterministic synthetic parameters (shapes of nn.Linear(C, C) + BatchNorm1d(C)).
    bound = 1.0 / (C ** 0.5)
    w1 = jax.random.uniform(kw1, (C, C), minval=-bound, maxval=bound, dtype=jnp.float32)
    b1 = jax.random.uniform(kb1, (C,), minval=-bound, maxval=bound, dtype=jnp.float32)
    w2 = jax.random.uniform(kw2, (C, C), minval=-bound, maxval=bound, dtype=jnp.float32)
    b2 = jax.random.uniform(kb2, (C,), minval=-bound, maxval=bound, dtype=jnp.float32)
    g1 = 1.0 + 0.1 * jax.random.normal(kg1, (C,), dtype=jnp.float32)
    be1 = 0.1 * jax.random.normal(kbe1, (C,), dtype=jnp.float32)
    g2 = 1.0 + 0.1 * jax.random.normal(kg2, (C,), dtype=jnp.float32)
    be2 = 0.1 * jax.random.normal(kbe2, (C,), dtype=jnp.float32)

    ref = res_fc_block_ref(x, w1, b1, g1, be1, w2, b2, g2, be2)

    # f32-matmul path: tight numerical check of the fused kernel semantics.
    params_f32 = prepare_res_fc_params(w1, g1, be1, w2, g2, be2, matmul_dtype=jnp.float32)
    out_f32 = jax.block_until_ready(res_fc_block_apply(x, params_f32))
    assert out_f32.shape == (B, C) and out_f32.dtype == jnp.float32
    assert jnp.allclose(out_f32, ref, atol=1e-4, rtol=1e-4), "f32 path mismatch vs reference"

    # bf16-matmul fast path (default): weights prepared once, reused per forward.
    params_bf16 = prepare_res_fc_params(w1, g1, be1, w2, g2, be2, matmul_dtype=jnp.bfloat16)
    out_bf16 = jax.block_until_ready(res_fc_block_apply(x, params_bf16))
    assert out_bf16.shape == (B, C) and out_bf16.dtype == jnp.float32
    assert jnp.allclose(out_bf16, ref, atol=5e-2, rtol=5e-2), "bf16 path mismatch vs reference"

    print("KERNEL_OK")
</pallas_src>

<mosaic_0001>
module attributes {stable_mosaic.version = 11 : i64} {
  func.func @_res_fc_kernel(%arg0: i32, %arg1: i32, %arg2: memref<8x128xf32, #tpu.memory_space<vmem>>, %arg3: memref<1x128x128xf32, #tpu.memory_space<vmem>>, %arg4: memref<1x1x128xf32, #tpu.memory_space<vmem>>, %arg5: memref<1x1x128xf32, #tpu.memory_space<vmem>>, %arg6: memref<8x128xf32, #tpu.memory_space<vmem>>, %arg7: memref<8x128xf32, #tpu.memory_space<vmem>>) attributes {dimension_semantics = [#tpu.dimension_semantics<arbitrary>, #tpu.dimension_semantics<arbitrary>], iteration_bounds = array<i64: 2, 1>, scalar_prefetch = 0 : i64, scratch_operands = 1 : i64, tpu.core_type = #tpu.core_type<tc>, window_params = [{pipeline_mode = #tpu.pipeline_mode<synchronous>, transform_indices = @transform_0, window_bounds = array<i64: 8, 128>}, {transform_indices = @transform_1, window_bounds = array<i64: 1, 128, 128>}, {transform_indices = @transform_2, window_bounds = array<i64: 1, 1, 128>}, {transform_indices = @transform_3, window_bounds = array<i64: 1, 1, 128>}, {transform_indices = @transform_4, window_bounds = array<i64: 8, 128>}]} {
    %c128_i32 = arith.constant 128 : i32
    %0 = arith.muli %arg1, %c128_i32 : i32
    %1 = tpu.assume_multiple %0, 128 : i32
    %c0 = arith.constant 0 : index
    %c0_0 = arith.constant 0 : index
    %c0_1 = arith.constant 0 : index
    %2 = vector.load %arg3[%c0, %c0_0, %c0_1] : memref<1x128x128xf32, #tpu.memory_space<vmem>>, vector<1x128x128xf32>
    %3 = vector.shape_cast %2 : vector<1x128x128xf32> to vector<128x128xf32>
    %c0_2 = arith.constant 0 : index
    %c0_3 = arith.constant 0 : index
    %c0_4 = arith.constant 0 : index
    %4 = vector.load %arg4[%c0_2, %c0_3, %c0_4] : memref<1x1x128xf32, #tpu.memory_space<vmem>>, vector<1x1x128xf32>
    %5 = vector.shape_cast %4 : vector<1x1x128xf32> to vector<1x128xf32>
    %c0_5 = arith.constant 0 : index
    %c0_6 = arith.constant 0 : index
    %c0_7 = arith.constant 0 : index
    %6 = vector.load %arg5[%c0_5, %c0_6, %c0_7] : memref<1x1x128xf32, #tpu.memory_space<vmem>>, vector<1x1x128xf32>
    %7 = vector.shape_cast %6 : vector<1x1x128xf32> to vector<1x128xf32>
    %c0_i32 = arith.constant 0 : i32
    %8 = arith.cmpi eq, %arg0, %c0_i32 : i32
    %9 = arith.extui %8 : i1 to i32
    %c0_i32_8 = arith.constant 0 : i32
    %10 = arith.cmpi ne, %9, %c0_i32_8 : i32
    scf.if %10 {
      %c0_10 = arith.constant 0 : index
      %c0_11 = arith.constant 0 : index
      %14 = vector.load %arg2[%c0_10, %c0_11] : memref<8x128xf32, #tpu.memory_space<vmem>>, vector<8x128xf32>
      %cst = arith.constant dense<0.000000e+00> : vector<8x128xf32>
      %15 = tpu.matmul %14, %3, %cst {dimension_numbers = #tpu.dot_dimension_numbers<[1], [0], [0], [1], [0, 0, 1, 1], [], []>} : vector<8x128xf32>, vector<128x128xf32>, vector<8x128xf32> -> vector<8x128xf32>
      %cst_12 = arith.constant dense<0.000000e+00> : vector<128xf32>
      %16 = vector.multi_reduction <add>, %15, %cst_12 [0] : vector<8x128xf32> to vector<128xf32>
      %17 = vector.shape_cast %16 : vector<128xf32> to vector<1x128xf32>
      %cst_13 = arith.constant 1.250000e-01 : f32
      %18 = vector.broadcast %cst_13 : f32 to vector<1x128xf32>
      %19 = arith.mulf %17, %18 : vector<1x128xf32>
      %20 = vector.broadcast %19 : vector<1x128xf32> to vector<8x128xf32>
      %21 = arith.subf %15, %20 : vector<8x128xf32>
      %22 = arith.mulf %21, %21 : vector<8x128xf32>
      %cst_14 = arith.constant dense<0.000000e+00> : vector<128xf32>
      %23 = vector.multi_reduction <add>, %22, %cst_14 [0] : vector<8x128xf32> to vector<128xf32>
      %24 = vector.shape_cast %23 : vector<128xf32> to vector<1x128xf32>
      %cst_15 = arith.constant 1.250000e-01 : f32
      %25 = vector.broadcast %cst_15 : f32 to vector<1x128xf32>
      %26 = arith.mulf %24, %25 : vector<1x128xf32>
      %cst_16 = arith.constant 9.99999974E-6 : f32
      %27 = vector.broadcast %cst_16 : f32 to vector<1x128xf32>
      %28 = arith.addf %26, %27 : vector<1x128xf32>
      %29 = math.rsqrt %28 : vector<1x128xf32>
      %30 = vector.broadcast %29 : vector<1x128xf32> to vector<8x128xf32>
      %31 = arith.mulf %21, %30 : vector<8x128xf32>
      %32 = vector.broadcast %5 : vector<1x128xf32> to vector<8x128xf32>
      %33 = arith.mulf %31, %32 : vector<8x128xf32>
      %34 = vector.broadcast %7 : vector<1x128xf32> to vector<8x128xf32>
      %35 = arith.addf %33, %34 : vector<8x128xf32>
      %cst_17 = arith.constant 0.000000e+00 : f32
      %36 = vector.broadcast %cst_17 : f32 to vector<8x128xf32>
      %37 = arith.maximumf %35, %36 : vector<8x128xf32>
      %c0_18 = arith.constant 0 : index
      %38 = arith.index_cast %1 : i32 to index
      %39 = vector.load %arg7[%c0_18, %38] : memref<8x128xf32, #tpu.memory_space<vmem>>, vector<8x128xf32>
      tpu.vector_store %arg7[%c0_18, %38], %37 {strides = array<i32>} : memref<8x128xf32, #tpu.memory_space<vmem>>, vector<8x128xf32>,
    } else {
    }
    %c1_i32 = arith.constant 1 : i32
    %11 = arith.cmpi eq, %arg0, %c1_i32 : i32
    %12 = arith.extui %11 : i1 to i32
    %c0_i32_9 = arith.constant 0 : i32
    %13 = arith.cmpi ne, %12, %c0_i32_9 : i32
    scf.if %13 {
      %c0_10 = arith.constant 0 : index
      %c0_11 = arith.constant 0 : index
      %14 = vector.load %arg7[%c0_10, %c0_11] : memref<8x128xf32, #tpu.memory_space<vmem>>, vector<8x128xf32>
      %cst = arith.constant dense<0.000000e+00> : vector<8x128xf32>
      %15 = tpu.matmul %14, %3, %cst {dimension_numbers = #tpu.dot_dimension_numbers<[1], [0], [0], [1], [0, 0, 1, 1], [], []>} : vector<8x128xf32>, vector<128x128xf32>, vector<8x128xf32> -> vector<8x128xf32>
      %cst_12 = arith.constant dense<0.000000e+00> : vector<128xf32>
      %16 = vector.multi_reduction <add>, %15, %cst_12 [0] : vector<8x128xf32> to vector<128xf32>
      %17 = vector.shape_cast %16 : vector<128xf32> to vector<1x128xf32>
      %cst_13 = arith.constant 1.250000e-01 : f32
      %18 = vector.broadcast %cst_13 : f32 to vector<1x128xf32>
      %19 = arith.mulf %17, %18 : vector<1x128xf32>
      %20 = vector.broadcast %19 : vector<1x128xf32> to vector<8x128xf32>
      %21 = arith.subf %15, %20 : vector<8x128xf32>
      %22 = arith.mulf %21, %21 : vector<8x128xf32>
      %cst_14 = arith.constant dense<0.000000e+00> : vector<128xf32>
      %23 = vector.multi_reduction <add>, %22, %cst_14 [0] : vector<8x128xf32> to vector<128xf32>
      %24 = vector.shape_cast %23 : vector<128xf32> to vector<1x128xf32>
      %cst_15 = arith.constant 1.250000e-01 : f32
      %25 = vector.broadcast %cst_15 : f32 to vector<1x128xf32>
      %26 = arith.mulf %24, %25 : vector<1x128xf32>
      %cst_16 = arith.constant 9.99999974E-6 : f32
      %27 = vector.broadcast %cst_16 : f32 to vector<1x128xf32>
      %28 = arith.addf %26, %27 : vector<1x128xf32>
      %29 = math.rsqrt %28 : vector<1x128xf32>
      %30 = vector.broadcast %29 : vector<1x128xf32> to vector<8x128xf32>
      %31 = arith.mulf %21, %30 : vector<8x128xf32>
      %32 = vector.broadcast %5 : vector<1x128xf32> to vector<8x128xf32>
      %33 = arith.mulf %31, %32 : vector<8x128xf32>
      %34 = vector.broadcast %7 : vector<1x128xf32> to vector<8x128xf32>
      %35 = arith.addf %33, %34 : vector<8x128xf32>
      %c0_17 = arith.constant 0 : index
      %36 = arith.index_cast %1 : i32 to index
      %37 = vector.load %arg2[%c0_17, %36] : memref<8x128xf32, #tpu.memory_space<vmem>>, vector<8x128xf32>
      %38 = arith.addf %35, %37 : vector<8x128xf32>
      %cst_18 = arith.constant 0.000000e+00 : f32
      %39 = vector.broadcast %cst_18 : f32 to vector<8x128xf32>
      %40 = arith.maximumf %38, %39 : vector<8x128xf32>
      %c0_19 = arith.constant 0 : index
      %c0_20 = arith.constant 0 : index
      %41 = vector.load %arg6[%c0_19, %c0_20] : memref<8x128xf32, #tpu.memory_space<vmem>>, vector<8x128xf32>
      tpu.vector_store %arg6[%c0_19, %c0_20], %40 {strides = array<i32>} : memref<8x128xf32, #tpu.memory_space<vmem>>, vector<8x128xf32>,
    } else {
    }
    return
  }
  func.func @transform_0(%arg0: i32, %arg1: i32) -> (i32, i32) {
    %c0_i32 = arith.constant 0 : i32
    %c0_i32_0 = arith.constant 0 : i32
    %c0_i32_1 = arith.constant 0 : i32
    return %c0_i32, %c0_i32_0 : i32, i32
  }
  func.func @transform_1(%arg0: i32, %arg1: i32) -> (i32, i32, i32) {
    %c0_i32 = arith.constant 0 : i32
    %c0_i32_0 = arith.constant 0 : i32
    return %arg0, %c0_i32, %arg1 : i32, i32, i32
  }
  func.func @transform_2(%arg0: i32, %arg1: i32) -> (i32, i32, i32) {
    %c0_i32 = arith.constant 0 : i32
    %c0_i32_0 = arith.constant 0 : i32
    return %arg0, %c0_i32, %arg1 : i32, i32, i32
  }
  func.func @transform_3(%arg0: i32, %arg1: i32) -> (i32, i32, i32) {
    %c0_i32 = arith.constant 0 : i32
    %c0_i32_0 = arith.constant 0 : i32
    return %arg0, %c0_i32, %arg1 : i32, i32, i32
  }
  func.func @transform_4(%arg0: i32, %arg1: i32) -> (i32, i32) {
    %0 = arith.muli %arg0, %arg1 : i32
    %c0_i32 = arith.constant 0 : i32
    %c0_i32_0 = arith.constant 0 : i32
    return %c0_i32, %0 : i32, i32
  }
}

</mosaic_0001>

<llo_original>
// kernel: tpu_custom_call.1
$region0: #{tpu_custom_call.1}
  #allocation0 [shape = 'u32[]', space=smem, size = 0x4, offset = 0x4, fixed_abs, tag = 'smem constant byte address 0x4 - core index']
  #allocation1 [shape = 'u32[144,128]{1,0:T(1,128)}', space=vmem, size = 0x12000, scoped, tag = 'internal scratch']
  #allocation2 [shape = 'f32[8,128]{1,0:T(8,128)}', space=vmem, size = 0x1000, scoped, tag = 'scratch operand']
  %s0 = inlined_call_operand.hbm [shape: f32[8,128], index: 0, kind: input, shape index: {}]
  %s1 = inlined_call_operand.hbm [shape: f32[2,128,128], index: 1, kind: input, shape index: {}]
  %s2 = inlined_call_operand.vmem [shape: f32[2,1,128], index: 2, kind: input, shape index: {}]
  %s3 = inlined_call_operand.vmem [shape: f32[2,1,128], index: 3, kind: input, shape index: {}]
  %s4 = inlined_call_operand.hbm [shape: f32[8,128], index: 4, kind: output, shape index: {}]
  %s5 = sld [smem:[#allocation0]]
  $region65: #{tpu_custom_call.1} parent=0
    _
  %s7 = ssub.s32 1, %s5
  %s8 = scalar_select 0, %s7, %s5
  $region1: #{tpu_custom_call.1} parent=0
    #allocation3 [shape = 'u8[4096]{0}', space=vmem, size = 0x1000, scoped, tag = 'input window, operand 0, single buffered']
    #allocation4 [shape = 's32[2]{0}', space=sflag, size = 0x8, scoped, tag = 'scoped memory for tpu_custom_call.1']
    #allocation5 [shape = 's32[2]{0}', space=sflag, size = 0x8, scoped, tag = 'scoped memory for tpu_custom_call.1']
    #allocation6 [shape = 'u8[131072]{0}', space=vmem, size = 0x20000, scoped, tag = 'input window, operand 1']
    #allocation7 [shape = 's32[2]{0}', space=sflag, size = 0x8, scoped, tag = 'scoped memory for tpu_custom_call.1']
    #allocation8 [shape = 'u8[8192]{0}', space=vmem, size = 0x2000, scoped, tag = 'output window, operand 0']
    %9 = vsyncpa [#allocation4], 0
    %10 = vsyncpa [#allocation7], 0
    %s11 = scalar_lea.sflag [#allocation7], 1
    %12 = vsyncpa %s11, 0
    %13 = vsyncpa [#allocation5], 0
    %s14 = scalar_lea.sflag [#allocation5], 1
    %15 = vsyncpa %s14, 0
    loop: start=0, step=1, limit=4
    $region2: #{tpu_custom_call.1} parent=1 // loop_pre_header
      _
    $region3: #{tpu_custom_call.1} parent=1 // loop_header
      %s17 = sphi 0, %s21
      %p18 = scmp.ge.s32.totalorder %s17, 4
      %s24 = sphi 0, %s36
      %s25 = sphi 0, %s32
      %s26 = sphi 0, %s24
      %s27 = sphi 0, %s25
      %s28 = sphi 0, %s26
      %s29 = sphi 0, %s27
      %s37 = sphi 0, %s37
      %s39 = sphi 0, %s37
      %s40 = sphi 0, %s39
      %s54 = sphi 0, %s40
      %s62 = sphi 0, %s64
      %s65 = sphi 0, %s62
      %s66 = sphi 0, %s65
      %s82 = sphi 0, %s66
      %s90 = sphi 0, %s92
      %s93 = sphi 0, %s90
      %s94 = sphi 0, %s93
      %s110 = sphi 0, %s94
      %s118 = sphi 0, %s120
      %s121 = sphi 0, %s118
      %s122 = sphi 0, %s121
      %s138 = sphi 0, %s122
      %s146 = sphi 0, %s148
      %s149 = sphi 0, %s146
      %s150 = sphi 0, %s149
      %s166 = sphi 0, %s150
    $region4: #{tpu_custom_call.1} parent=1 // loop_header_branch
      %20 = sbr.rel (%p18) target = $region8
    $region5: #{tpu_custom_call.1} parent=1 // loop_body
      %s22 = ssub.s32 %s17, 1
      %s23 = ssub.s32 %s17, 2
      %s30 = sadd.s32 1, %s25
      %p31 = scmp.ge.s32.totalorder %s30, 1
      %s32 = scalar_select %p31, 0, %s30
      %s33 = sadd.s32 1, %s24
      %s34 = scalar_select %p31, %s33, %s24
      %p35 = scmp.ge.s32.totalorder %s34, 2
      %s36 = scalar_select %p35, 0, %s34
      %s38 = sadd.s32 %s37, 1
      %p41 = scmp.eq.s32.totalorder %s17, 1
      %p42 = scmp.ne.s32.totalorder %s37, %s39
      %p43 = scmp.eq.s32.totalorder %s17, 0
      %p44 = por %p42, %p43
      %p45 = scmp.ne.s32.totalorder %s37, %s39
      %p46 = scmp.eq.s32.totalorder %s22, 1
      %p47 = por %p45, %p46
      %p48 = scmp.ne.s32.totalorder %s39, %s40
      %p49 = scmp.eq.s32.totalorder %s22, 0
      %p50 = por %p48, %p49
      %p51 = scmp.ne.s32.totalorder %s39, %s40
      %p52 = scmp.eq.s32.totalorder %s23, 1
      %p53 = por %p51, %p52
      %p55 = scmp.ne.s32.totalorder %s40, %s54
      %p56 = scmp.eq.s32.totalorder %s23, 0
      %p57 = por %p55, %p56
      %s58 = ssub.s32 %s24, %s36
      %s59 = ssub.s32 %s25, %s32
      %s60 = sor.u32 %s58, %s59
      %p61 = scmp.eq.s32.totalorder %s60, 0
      %s63 = sadd.s32 %s62, 1
      %s64 = scalar_select %p61, %s62, %s63
      %p67 = pneg %p61
      %p68 = scmp.eq.s32.totalorder %s17, 1
      %p69 = por %p67, %p68
      %p70 = scmp.ne.s32.totalorder %s62, %s65
      %p71 = scmp.eq.s32.totalorder %s17, 0
      %p72 = por %p70, %p71
      %p73 = scmp.ne.s32.totalorder %s62, %s65
      %p74 = scmp.eq.s32.totalorder %s22, 1
      %p75 = por %p73, %p74
      %p76 = scmp.ne.s32.totalorder %s65, %s66
      %p77 = scmp.eq.s32.totalorder %s22, 0
      %p78 = por %p76, %p77
      %p79 = scmp.ne.s32.totalorder %s65, %s66
      %p80 = scmp.eq.s32.totalorder %s23, 1
      %p81 = por %p79, %p80
      %p83 = scmp.ne.s32.totalorder %s66, %s82
      %p84 = scmp.eq.s32.totalorder %s23, 0
      %p85 = por %p83, %p84
      %s86 = ssub.s32 %s24, %s36
      %s87 = ssub.s32 %s25, %s32
      %s88 = sor.u32 %s86, %s87
      %p89 = scmp.eq.s32.totalorder %s88, 0
      %s91 = sadd.s32 %s90, 1
      %s92 = scalar_select %p89, %s90, %s91
      %p95 = pneg %p89
      %p96 = scmp.eq.s32.totalorder %s17, 1
      %p97 = por %p95, %p96
      %p98 = scmp.ne.s32.totalorder %s90, %s93
      %p99 = scmp.eq.s32.totalorder %s17, 0
      %p100 = por %p98, %p99
      %p101 = scmp.ne.s32.totalorder %s90, %s93
      %p102 = scmp.eq.s32.totalorder %s22, 1
      %p103 = por %p101, %p102
      %p104 = scmp.ne.s32.totalorder %s93, %s94
      %p105 = scmp.eq.s32.totalorder %s22, 0
      %p106 = por %p104, %p105
      %p107 = scmp.ne.s32.totalorder %s93, %s94
      %p108 = scmp.eq.s32.totalorder %s23, 1
      %p109 = por %p107, %p108
      %p111 = scmp.ne.s32.totalorder %s94, %s110
      %p112 = scmp.eq.s32.totalorder %s23, 0
      %p113 = por %p111, %p112
      %s114 = ssub.s32 %s24, %s36
      %s115 = ssub.s32 %s25, %s32
      %s116 = sor.u32 %s114, %s115
      %p117 = scmp.eq.s32.totalorder %s116, 0
      %s119 = sadd.s32 %s118, 1
      %s120 = scalar_select %p117, %s118, %s119
      %p123 = pneg %p117
      %p124 = scmp.eq.s32.totalorder %s17, 1
      %p125 = por %p123, %p124
      %p126 = scmp.ne.s32.totalorder %s118, %s121
      %p127 = scmp.eq.s32.totalorder %s17, 0
      %p128 = por %p126, %p127
      %p129 = scmp.ne.s32.totalorder %s118, %s121
      %p130 = scmp.eq.s32.totalorder %s22, 1
      %p131 = por %p129, %p130
      %p132 = scmp.ne.s32.totalorder %s121, %s122
      %p133 = scmp.eq.s32.totalorder %s22, 0
      %p134 = por %p132, %p133
      %p135 = scmp.ne.s32.totalorder %s121, %s122
      %p136 = scmp.eq.s32.totalorder %s23, 1
      %p137 = por %p135, %p136
      %p139 = scmp.ne.s32.totalorder %s122, %s138
      %p140 = scmp.eq.s32.totalorder %s23, 0
      %p141 = por %p139, %p140
      %s142 = smul.u32 %s24, %s25
      %s143 = smul.u32 %s36, %s32
      %s144 = ssub.s32 %s142, %s143
      %p145 = scmp.eq.s32.totalorder %s144, 0
      %s147 = sadd.s32 %s146, 1
      %s148 = scalar_select %p145, %s146, %s147
      %p151 = pneg %p145
      %p152 = scmp.eq.s32.totalorder %s17, 1
      %p153 = por %p151, %p152
      %p154 = scmp.ne.s32.totalorder %s146, %s149
      %p155 = scmp.eq.s32.totalorder %s17, 0
      %p156 = por %p154, %p155
      %p157 = scmp.ne.s32.totalorder %s146, %s149
      %p158 = scmp.eq.s32.totalorder %s22, 1
      %p159 = por %p157, %p158
      %p160 = scmp.ne.s32.totalorder %s149, %s150
      %p161 = scmp.eq.s32.totalorder %s22, 0
      %p162 = por %p160, %p161
      %p163 = scmp.ne.s32.totalorder %s149, %s150
      %p164 = scmp.eq.s32.totalorder %s23, 1
      %p165 = por %p163, %p164
      %p167 = scmp.ne.s32.totalorder %s150, %s166
      %p168 = scmp.eq.s32.totalorder %s23, 0
      %p169 = por %p167, %p168
      %p170 = scmp.le.s32.totalorder 1, %s17
      %p171 = scmp.lt.s32.totalorder %s17, 3
      %p172 = pnand %p170, %p171
      %p173 = pneg %p172
      // Predicated region
      $region9: #{tpu_custom_call.1} parent=5 // pred_check
        _
      $region10: #{tpu_custom_call.1} parent=5 // pred_check_branch
        %175 = sbr.rel (%p172) target = $region12
      $region11: #{tpu_custom_call.1} parent=5 // pred_region
        %s176 = ssub.s32 %s17, 1
        // Predicated region
        $region13: #{tpu_custom_call.1} parent=11 // pred_check
          %p177 = pneg %p50
        $region14: #{tpu_custom_call.1} parent=11 // pred_check_branch
          %179 = sbr.rel (%p177) target = $region16
        $region15: #{tpu_custom_call.1} parent=11 // pred_region
          %s181 = ssub.s32 128, 128
          %182 = vsyncadd [#allocation4], %s181
          %s184 = sshll.u32 [#allocation3], 4
          %s185 = int_to_ptr.vmem [resolvable:$true] %s184
          %187 = dma.hbm_to_vmem [thread:$0]  %s0, 128, %s185, [#allocation4]
        $region16: #{tpu_custom_call.1} parent=11 // pred_fallthru
          _
      $region12: #{tpu_custom_call.1} parent=5 // pred_fallthru
        _
      %p188 = scmp.lt.s32.totalorder %s17, 2
      // Predicated region
      $region17: #{tpu_custom_call.1} parent=5 // pred_check
        %p189 = pneg %p188
      $region18: #{tpu_custom_call.1} parent=5 // pred_check_branch
        %191 = sbr.rel (%p189) target = $region20
      $region19: #{tpu_custom_call.1} parent=5 // pred_region
        // Predicated region
        $region21: #{tpu_custom_call.1} parent=19 // pred_check
          %p192 = pneg %p72
        $region22: #{tpu_custom_call.1} parent=19 // pred_check_branch
          %194 = sbr.rel (%p192) target = $region24
        $region23: #{tpu_custom_call.1} parent=19 // pred_region
          %s195 = sand.u32 %s62, 1
          %s196 = scalar_lea.sflag [#allocation7], %s195
          %s197 = sand.u32 %s62, 1
          %s198 = smul.addr %s197, 128
          %s199 = scalar_lea.vmem [#allocation6], %s198
          %s201 = ssub.s32 2048, 2048
          %202 = vsyncadd %s196, %s201
          %s203 = smul.addr %s24, 16
          %s204 = sadd.s32 %s25, %s203
          %s205 = smul.addr %s204, 128
          %s206 = scalar_lea.hbm %s1, %s205
          %s207 = sshll.u32 %s199, 4
          %s208 = int_to_ptr.vmem [resolvable:$true] %s207
          %213 = dma.hbm_to_vmem [thread:$0]  %s206, 2048, %s208, %s196, 128, 128, 8
        $region24: #{tpu_custom_call.1} parent=19 // pred_fallthru
          _
        // Predicated region
        $region25: #{tpu_custom_call.1} parent=19 // pred_check
          %p214 = pneg %p100
        $region26: #{tpu_custom_call.1} parent=19 // pred_check_branch
          %216 = sbr.rel (%p214) target = $region28
        $region27: #{tpu_custom_call.1} parent=19 // pred_region
          %p217 = scmp.lt.s32.totalorder %s24, 1
          %s218 = scalar_select %p217, %s24, 1
          %p219 = scmp.lt.s32.totalorder %s25, 0
          %s220 = scalar_select %p219, %s25, 0
          %s221 = sadd.s32 %s220, %s218
          %s222 = scalar_lea.vmem %s2, %s221
        $region28: #{tpu_custom_call.1} parent=19 // pred_fallthru
          _
        // Predicated region
        $region29: #{tpu_custom_call.1} parent=19 // pred_check
          %p223 = pneg %p128
        $region30: #{tpu_custom_call.1} parent=19 // pred_check_branch
          %225 = sbr.rel (%p223) target = $region32
        $region31: #{tpu_custom_call.1} parent=19 // pred_region
          %p226 = scmp.lt.s32.totalorder %s24, 1
          %s227 = scalar_select %p226, %s24, 1
          %p228 = scmp.lt.s32.totalorder %s25, 0
          %s229 = scalar_select %p228, %s25, 0
          %s230 = sadd.s32 %s229, %s227
          %s231 = scalar_lea.vmem %s3, %s230
        $region32: #{tpu_custom_call.1} parent=19 // pred_fallthru
          _
      $region20: #{tpu_custom_call.1} parent=5 // pred_fallthru
        _
      %p232 = scmp.le.s32.totalorder 1, %s17
      %p233 = scmp.lt.s32.totalorder %s17, 3
      %p234 = pnand %p232, %p233
      %p235 = pneg %p234
      // Predicated region
      $region33: #{tpu_custom_call.1} parent=5 // pred_check
        _
      $region34: #{tpu_custom_call.1} parent=5 // pred_check_branch
        %237 = sbr.rel (%p234) target = $region36
      $region35: #{tpu_custom_call.1} parent=5 // pred_region
        %s238 = ssub.s32 %s17, 1
        // Predicated region
        $region37: #{tpu_custom_call.1} parent=35 // pred_check
          %p239 = pneg %p50
        $region38: #{tpu_custom_call.1} parent=35 // pred_check_branch
          %241 = sbr.rel (%p239) target = $region40
        $region39: #{tpu_custom_call.1} parent=35 // pred_region
          %242 = dma.done [#allocation4], 128
        $region40: #{tpu_custom_call.1} parent=35 // pred_fallthru
          _
        %s243 = sand.u32 %s65, 1
        %s244 = scalar_lea.sflag [#allocation7], %s243
        %s245 = sand.u32 %s65, 1
        %s246 = smul.addr %s245, 128
        %s247 = scalar_lea.vmem [#allocation6], %s246
        // Predicated region
        $region41: #{tpu_custom_call.1} parent=35 // pred_check
          %p248 = pneg %p78
        $region42: #{tpu_custom_call.1} parent=35 // pred_check_branch
          %250 = sbr.rel (%p248) target = $region44
        $region43: #{tpu_custom_call.1} parent=35 // pred_region
          %251 = dma.done %s244, 2048
        $region44: #{tpu_custom_call.1} parent=35 // pred_fallthru
          _
        %p252 = pneg %p50
        %p253 = pneg %p47
        %s254 = sand.u32 %s65, 1
        %s255 = scalar_lea.sflag [#allocation7], %s254
        %s256 = sand.u32 %s65, 1
        %s257 = smul.addr %s256, 128
        %s258 = scalar_lea.vmem [#allocation6], %s257
        %p259 = pneg %p78
        %p260 = pneg %p75
        %p261 = scmp.lt.s32.totalorder %s26, 1
        %s262 = scalar_select %p261, %s26, 1
        %p263 = scmp.lt.s32.totalorder %s27, 0
        %s264 = scalar_select %p263, %s27, 0
        %s265 = sadd.s32 %s264, %s262
        %s266 = scalar_lea.vmem %s2, %s265
        %p267 = pneg %p106
        %p268 = pneg %p103
        %p269 = scmp.lt.s32.totalorder %s26, 1
        %s270 = scalar_select %p269, %s26, 1
        %p271 = scmp.lt.s32.totalorder %s27, 0
        %s272 = scalar_select %p271, %s27, 0
        %s273 = sadd.s32 %s272, %s270
        %s274 = scalar_lea.vmem %s3, %s273
        %p275 = pneg %p134
        %p276 = pneg %p131
        %p277 = pneg %p162
        %p278 = pneg %p159
        %s279 = sand.u32 %s149, 1
        %s280 = scalar_lea.sflag [#allocation5], %s279
        %s281 = sand.u32 %s149, 1
        %s282 = smul.addr %s281, 8
        %s283 = scalar_lea.vmem [#allocation8], %s282
        %p284 = scmp.lt.s32.totalorder %s26, 1
        %s285 = scalar_select %p284, %s26, 1
        %p286 = scmp.lt.s32.totalorder %s27, 0
        %s287 = scalar_select %p286, %s27, 0
        %s288 = sadd.s32 %s287, %s285
        %s289 = scalar_lea.vmem %s2, %s288
        %p290 = scmp.lt.s32.totalorder %s26, 1
        %s291 = scalar_select %p290, %s26, 1
        %p292 = scmp.lt.s32.totalorder %s27, 0
        %s293 = scalar_select %p292, %s27, 0
        %s294 = sadd.s32 %s293, %s291
        %s295 = scalar_lea.vmem %s3, %s294
        %s296 = smul.u32 %s26, %s27
        %s297 = smul.u32 %s27, 128
        %v298 = vld [vmem:[%s247] sm:$0xff]
        %v299 = vld [vmem:[%s247 + $0x8] sm:$0xff]
        %v300 = vld [vmem:[%s247 + $0x10] sm:$0xff]
        %v301 = vld [vmem:[%s247 + $0x18] sm:$0xff]
        %v302 = vld [vmem:[%s247 + $0x20] sm:$0xff]
        %v303 = vld [vmem:[%s247 + $0x28] sm:$0xff]
        %v304 = vld [vmem:[%s247 + $0x30] sm:$0xff]
        %v305 = vld [vmem:[%s247 + $0x38] sm:$0xff]
        %v306 = vld [vmem:[%s247 + $0x40] sm:$0xff]
        %v307 = vld [vmem:[%s247 + $0x48] sm:$0xff]
        %v308 = vld [vmem:[%s247 + $0x50] sm:$0xff]
        %v309 = vld [vmem:[%s247 + $0x58] sm:$0xff]
        %v310 = vld [vmem:[%s247 + $0x60] sm:$0xff]
        %v311 = vld [vmem:[%s247 + $0x68] sm:$0xff]
        %v312 = vld [vmem:[%s247 + $0x70] sm:$0xff]
        %v313 = vld [vmem:[%s247 + $0x78] sm:$0xff]
        %v314 = vld [vmem:[%s289] sm:$0x1]
        %v315 = vld [vmem:[%s295] sm:$0x1]
        %p316 = scmp.eq.s32.totalorder %s26, 0
        // Predicated region
        $region45: #{tpu_custom_call.1} parent=35 // pred_check
          %p317 = pneg %p316
        $region46: #{tpu_custom_call.1} parent=35 // pred_check_branch
          %319 = sbr.rel (%p317) target = $region48
        $region47: #{tpu_custom_call.1} parent=35 // pred_region
          %v320 = vld [vmem:[#allocation3] sm:$0xff]
          %321 = vmatprep.subr.mxu0 0.0
          %322 = vmatpush1.msra.mxu0 %v298
          %323 = vmatprep.subr.mxu0 0.0
          %324 = vmatpush1.msra.mxu0 %v299
          %325 = vmatprep.subr.mxu0 0.0
          %326 = vmatpush1.msra.mxu0 %v300
          %327 = vmatprep.subr.mxu0 0.0
          %328 = vmatpush1.msra.mxu0 %v301
          %329 = vmatprep.subr.mxu0 0.0
          %330 = vmatpush1.msra.mxu0 %v302
          %331 = vmatprep.subr.mxu0 0.0
          %332 = vmatpush1.msra.mxu0 %v303
          %333 = vmatprep.subr.mxu0 0.0
          %334 = vmatpush1.msra.mxu0 %v304
          %335 = vmatprep.subr.mxu0 0.0
          %336 = vmatpush1.msra.mxu0 %v305
          %337 = vmatprep.subr.mxu0 0.0
          %338 = vmatpush1.msra.mxu0 %v306
          %339 = vmatprep.subr.mxu0 0.0
          %340 = vmatpush1.msra.mxu0 %v307
          %341 = vmatprep.subr.mxu0 0.0
          %342 = vmatpush1.msra.mxu0 %v308
          %343 = vmatprep.subr.mxu0 0.0
          %344 = vmatpush1.msra.mxu0 %v309
          %345 = vmatprep.subr.mxu0 0.0
          %346 = vmatpush1.msra.mxu0 %v310
          %347 = vmatprep.subr.mxu0 0.0
          %348 = vmatpush1.msra.mxu0 %v311
          %349 = vmatprep.subr.mxu0 0.0
          %350 = vmatpush1.msra.mxu0 %v312
          %351 = vmatprep.subr.mxu0 0.0
          %352 = vmatpush1.msra.mxu0 %v313
          %353 = vmatprep.subr.mxu0 0.0
          %354 = vmatpush1.msra.mxu0 0.0
          %355 = vmatprep.subr.mxu0 0.0
          %356 = vmatpush1.msra.mxu0 0.0
          %357 = vmatprep.subr.mxu0 0.0
          %358 = vmatpush1.msra.mxu0 0.0
          %359 = vmatprep.subr.mxu0 0.0
          %360 = vmatpush1.msra.mxu0 0.0
          %361 = vmatprep.subr.mxu0 0.0
          %362 = vmatpush1.msra.mxu0 0.0
          %363 = vmatprep.subr.mxu0 0.0
          %364 = vmatpush1.msra.mxu0 0.0
          %365 = vmatprep.subr.mxu0 0.0
          %366 = vmatpush1.msra.mxu0 0.0
          %367 = vmatprep.subr.mxu0 0.0
          %368 = vmatpush1.msra.mxu0 0.0
          %369 = vmatprep.subr.mxu0 0.0
          %370 = vmatpush1.msra.mxu0 0.0
          %371 = vmatprep.subr.mxu0 0.0
          %372 = vmatpush1.msra.mxu0 0.0
          %373 = vmatprep.subr.mxu0 0.0
          %374 = vmatpush1.msra.mxu0 0.0
          %375 = vmatprep.subr.mxu0 0.0
          %376 = vmatpush1.msra.mxu0 0.0
          %377 = vmatprep.subr.mxu0 0.0
          %378 = vmatpush1.msra.mxu0 0.0
          %379 = vmatprep.subr.mxu0 0.0
          %380 = vmatpush1.msra.mxu0 0.0
          %381 = vmatprep.subr.mxu0 0.0
          %382 = vmatpush1.msra.mxu0 0.0
          %383 = vmatprep.subr.mxu0 0.0
          %384 = vmatpush1.msra.mxu0 0.0
          %385 = vmatprep.mubr.f32.mxu0 0.0
          %386 = vmatmul.mubr.f32.gmra.mrb[0].mxu0 %v320
          %v387 = vpop.f32.mrb[0].mxu0
          %v388 = vadd.f32 0.0, %v387
          %v389 = vpop.f32.mrb[0].mxu0
          %390 = vdwg.mxu0
          %v391 = vrot.slane %v388, 4
          %v392 = vadd.f32 %v388, %v391
          %v393 = vrot.slane %v392, 2
          %v394 = vadd.f32 %v392, %v393
          %v395 = vrot.slane %v394, 1
          %v396 = vadd.f32 %v394, %v395
          %v397 = vmul.f32 %v396, 0.125
          %v398 = vsub.f32 %v388, %v397
          %v399 = vmul.f32 %v398, %v398
          %v400 = vrot.slane %v399, 4
          %v401 = vadd.f32 %v399, %v400
          %v402 = vrot.slane %v401, 2
          %v403 = vadd.f32 %v401, %v402
          %v404 = vrot.slane %v403, 1
          %v405 = vadd.f32 %v403, %v404
          %v406 = vmul.f32 %v405, 0.125
          %v407 = vadd.f32 %v406, 1e-05
          %v408 = vrsqrt.pop %v407
          %v409 = vmul.f32 %v398, %v408
          %v411 = vlaneseq
          %v412 = vshrl.u32 %v411, 7
          %v413 = vsub.s32 0, %v412
          %v414 = vrot.slane %v314, %v413
          %v416 = vmul.f32 %v409, %v414
          %v418 = vlaneseq
          %v419 = vshrl.u32 %v418, 7
          %v420 = vsub.s32 0, %v419
          %v421 = vrot.slane %v315, %v420
          %v423 = vadd.f32 %v416, %v421
          %v424 = vmax.f32 %v423, 0.0
          %s425 = sshra.s32 %s297, 7
          %s426 = sand.u32 %s297, 127
          %s427 = scalar_lea.vmem [#allocation2], %s425
          %428 = vst [vmem:[%s427] sm:$0xff] %v424
        $region48: #{tpu_custom_call.1} parent=35 // pred_fallthru
          _
        %p429 = scmp.eq.s32.totalorder %s26, 1
        // Predicated region
        $region49: #{tpu_custom_call.1} parent=35 // pred_check
          %p430 = pneg %p429
        $region50: #{tpu_custom_call.1} parent=35 // pred_check_branch
          %432 = sbr.rel (%p430) target = $region52
        $region51: #{tpu_custom_call.1} parent=35 // pred_region
          %v433 = vld [vmem:[#allocation2] sm:$0xff]
          %434 = vmatprep.subr.mxu0 0.0
          %435 = vmatpush1.msra.mxu0 %v298
          %436 = vmatprep.subr.mxu0 0.0
          %437 = vmatpush1.msra.mxu0 %v299
          %438 = vmatprep.subr.mxu0 0.0
          %439 = vmatpush1.msra.mxu0 %v300
          %440 = vmatprep.subr.mxu0 0.0
          %441 = vmatpush1.msra.mxu0 %v301
          %442 = vmatprep.subr.mxu0 0.0
          %443 = vmatpush1.msra.mxu0 %v302
          %444 = vmatprep.subr.mxu0 0.0
          %445 = vmatpush1.msra.mxu0 %v303
          %446 = vmatprep.subr.mxu0 0.0
          %447 = vmatpush1.msra.mxu0 %v304
          %448 = vmatprep.subr.mxu0 0.0
          %449 = vmatpush1.msra.mxu0 %v305
          %450 = vmatprep.subr.mxu0 0.0
          %451 = vmatpush1.msra.mxu0 %v306
          %452 = vmatprep.subr.mxu0 0.0
          %453 = vmatpush1.msra.mxu0 %v307
          %454 = vmatprep.subr.mxu0 0.0
          %455 = vmatpush1.msra.mxu0 %v308
          %456 = vmatprep.subr.mxu0 0.0
          %457 = vmatpush1.msra.mxu0 %v309
          %458 = vmatprep.subr.mxu0 0.0
          %459 = vmatpush1.msra.mxu0 %v310
          %460 = vmatprep.subr.mxu0 0.0
          %461 = vmatpush1.msra.mxu0 %v311
          %462 = vmatprep.subr.mxu0 0.0
          %463 = vmatpush1.msra.mxu0 %v312
          %464 = vmatprep.subr.mxu0 0.0
          %465 = vmatpush1.msra.mxu0 %v313
          %466 = vmatprep.subr.mxu0 0.0
          %467 = vmatpush1.msra.mxu0 0.0
          %468 = vmatprep.subr.mxu0 0.0
          %469 = vmatpush1.msra.mxu0 0.0
          %470 = vmatprep.subr.mxu0 0.0
          %471 = vmatpush1.msra.mxu0 0.0
          %472 = vmatprep.subr.mxu0 0.0
          %473 = vmatpush1.msra.mxu0 0.0
          %474 = vmatprep.subr.mxu0 0.0
          %475 = vmatpush1.msra.mxu0 0.0
          %476 = vmatprep.subr.mxu0 0.0
          %477 = vmatpush1.msra.mxu0 0.0
          %478 = vmatprep.subr.mxu0 0.0
          %479 = vmatpush1.msra.mxu0 0.0
          %480 = vmatprep.subr.mxu0 0.0
          %481 = vmatpush1.msra.mxu0 0.0
          %482 = vmatprep.subr.mxu0 0.0
          %483 = vmatpush1.msra.mxu0 0.0
          %484 = vmatprep.subr.mxu0 0.0
          %485 = vmatpush1.msra.mxu0 0.0
          %486 = vmatprep.subr.mxu0 0.0
          %487 = vmatpush1.msra.mxu0 0.0
          %488 = vmatprep.subr.mxu0 0.0
          %489 = vmatpush1.msra.mxu0 0.0
          %490 = vmatprep.subr.mxu0 0.0
          %491 = vmatpush1.msra.mxu0 0.0
          %492 = vmatprep.subr.mxu0 0.0
          %493 = vmatpush1.msra.mxu0 0.0
          %494 = vmatprep.subr.mxu0 0.0
          %495 = vmatpush1.msra.mxu0 0.0
          %496 = vmatprep.subr.mxu0 0.0
          %497 = vmatpush1.msra.mxu0 0.0
          %498 = vmatprep.mubr.f32.mxu0 0.0
          %499 = vmatmul.mubr.f32.gmra.mrb[0].mxu0 %v433
          %v500 = vpop.f32.mrb[0].mxu0
          %v501 = vadd.f32 0.0, %v500
          %v502 = vpop.f32.mrb[0].mxu0
          %503 = vdwg.mxu0
          %v504 = vrot.slane %v501, 4
          %v505 = vadd.f32 %v501, %v504
          %v506 = vrot.slane %v505, 2
          %v507 = vadd.f32 %v505, %v506
          %v508 = vrot.slane %v507, 1
          %v509 = vadd.f32 %v507, %v508
          %v510 = vmul.f32 %v509, 0.125
          %v511 = vsub.f32 %v501, %v510
          %v512 = vmul.f32 %v511, %v511
          %v513 = vrot.slane %v512, 4
          %v514 = vadd.f32 %v512, %v513
          %v515 = vrot.slane %v514, 2
          %v516 = vadd.f32 %v514, %v515
          %v517 = vrot.slane %v516, 1
          %v518 = vadd.f32 %v516, %v517
          %v519 = vmul.f32 %v518, 0.125
          %v520 = vadd.f32 %v519, 1e-05
          %v521 = vrsqrt.pop %v520
          %v522 = vmul.f32 %v511, %v521
          %v524 = vlaneseq
          %v525 = vshrl.u32 %v524, 7
          %v526 = vsub.s32 0, %v525
          %v527 = vrot.slane %v314, %v526
          %v529 = vmul.f32 %v522, %v527
          %v531 = vlaneseq
          %v532 = vshrl.u32 %v531, 7
          %v533 = vsub.s32 0, %v532
          %v534 = vrot.slane %v315, %v533
          %v536 = vadd.f32 %v529, %v534
          %s537 = sshra.s32 %s297, 7
          %s538 = sand.u32 %s297, 127
          %s539 = scalar_lea.vmem [#allocation3], %s537
          %v540 = vld [vmem:[%s539] sm:$0xff]
          %v541 = vadd.f32 %v536, %v540
          %v542 = vmax.f32 %v541, 0.0
          %543 = vst [vmem:[%s283] sm:$0xff] %v542
        $region52: #{tpu_custom_call.1} parent=35 // pred_fallthru
          _
        %s544 = sand.u32 %s149, 1
        %s545 = scalar_lea.sflag [#allocation5], %s544
        %s546 = sand.u32 %s149, 1
        %s547 = smul.addr %s546, 8
        %s548 = scalar_lea.vmem [#allocation8], %s547
        // Predicated region
        $region53: #{tpu_custom_call.1} parent=35 // pred_check
          %p549 = pneg %p159
        $region54: #{tpu_custom_call.1} parent=35 // pred_check_branch
          %551 = sbr.rel (%p549) target = $region56
        $region55: #{tpu_custom_call.1} parent=35 // pred_region
          %s552 = smul.u32 %s26, %s27
          %s554 = ssub.s32 128, 128
          %555 = vsyncadd %s545, %s554
          %s556 = smul.addr %s552, 128
          %s557 = scalar_lea.hbm %s4, %s556
          %s559 = sshll.u32 %s548, 4
          %s560 = int_to_ptr.vmem [resolvable:$true] %s559
          %562 = dma.vmem_to_hbm [thread:$0]  %s560, 128, %s557, %s545
        $region56: #{tpu_custom_call.1} parent=35 // pred_fallthru
          _
      $region36: #{tpu_custom_call.1} parent=5 // pred_fallthru
        _
      %p563 = scmp.le.s32.totalorder 2, %s17
      // Predicated region
      $region57: #{tpu_custom_call.1} parent=5 // pred_check
        %p564 = pneg %p563
      $region58: #{tpu_custom_call.1} parent=5 // pred_check_branch
        %566 = sbr.rel (%p564) target = $region60
      $region59: #{tpu_custom_call.1} parent=5 // pred_region
        %s567 = ssub.s32 %s17, 2
        // Predicated region
        $region61: #{tpu_custom_call.1} parent=59 // pred_check
          %p568 = pneg %p165
        $region62: #{tpu_custom_call.1} parent=59 // pred_check_branch
          %570 = sbr.rel (%p568) target = $region64
        $region63: #{tpu_custom_call.1} parent=59 // pred_region
          %s571 = sand.u32 %s150, 1
          %s572 = scalar_lea.sflag [#allocation5], %s571
          %s573 = sand.u32 %s150, 1
          %s574 = smul.addr %s573, 8
          %s575 = scalar_lea.vmem [#allocation8], %s574
          %576 = dma.done %s572, 128
        $region64: #{tpu_custom_call.1} parent=59 // pred_fallthru
          _
      $region60: #{tpu_custom_call.1} parent=5 // pred_fallthru
        _
    $region6: #{tpu_custom_call.1} parent=1 // loop_footer
      %s21 = sadd.s32 1, %s17
    $region7: #{tpu_custom_call.1} parent=1 // loop_footer_branch
      %16 = sbr.rel target = $region3
    $region8: #{tpu_custom_call.1} parent=1 // loop_exit
      _
    %577 = vsyncpa [#allocation4], 1
    %s578 = scalar_lea.sflag [#allocation4], 1
    %579 = vsyncpa %s578, 1
    %580 = vsyncpa [#allocation7], 1
    %s581 = scalar_lea.sflag [#allocation7], 1
    %582 = vsyncpa %s581, 1
    %583 = vsyncpa [#allocation5], 1
    %s584 = scalar_lea.sflag [#allocation5], 1
    %585 = vsyncpa %s584, 1

</llo_original>
